<compile_context>
chip_gen: v7x
topology: tpu7x:2x2x1
jax: 0.10.0
libtpu: 0.0.40
codegen_flags: <defaults>
</compile_context>

<pallas_src>
import functools

import jax
import jax.numpy as jnp
from jax.experimental import pallas as pl
from jax.experimental.pallas import tpu as pltpu

HIDDEN = 32


def _round_up(n, m):
    return (n + m - 1) // m * m


# -----------------------------------------------------------------------------
# Kernel (transposed / batch-in-lanes layout)
# -----------------------------------------------------------------------------
def _latent_io_kernel(*refs, has_u):
    if has_u:
        xt_ref, ut_ref, we_ref, wa_ref, wb_ref, vec_ref, bq2_ref, out_ref = refs
    else:
        xt_ref, we_ref, wa_ref, wb_ref, vec_ref, bq2_ref, out_ref = refs
        ut_ref = None

    xt = xt_ref[...]          # (idp, TB)   x^T, zero-padded rows
    we = we_ref[...]          # (32, idp)   encoder.0 weight^T (zero-padded cols)
    wa = wa_ref[...]          # (32, 32)    fused (encoder.2 @ dyn.0[z])^T
    wb = wb_ref[...]          # (32, 32)    fused (dyn.2 @ decoder.0)^T
    vec = vec_ref[...]        # (32, 8)     bias / vector columns

    be1 = vec[:, 0:1]         # encoder.0 bias
    b_a = vec[:, 1:2]         # folded bias: be2 @ Wdz + bd1
    b_b = vec[:, 2:3]         # folded bias: bd2 @ Wq1 + bq1
    wdu = vec[:, 3:4]         # dyn.0 weight row for u (as a column)
    wq2 = vec[:, 4:5]         # decoder.2 weight (as a column)
    bq2 = bq2_ref[0, 0]       # decoder.2 bias (SMEM scalar)

    # encoder.0 + ReLU      : (32, idp) @ (idp, TB)
    h1 = jnp.maximum(jnp.dot(we, xt, preferred_element_type=jnp.float32) + be1, 0.0)

    # fused encoder.2 -> dyn.0 (z part), plus rank-1 u term on the VPU
    pre = jnp.dot(wa, h1, preferred_element_type=jnp.float32) + b_a
    if has_u:
        pre = pre + wdu * ut_ref[...]          # (32,1) * (1,TB) broadcast
    h2 = jnp.tanh(pre)

    # fused dyn.2 -> decoder.0 + ReLU
    h3 = jnp.maximum(jnp.dot(wb, h2, preferred_element_type=jnp.float32) + b_b, 0.0)

    # decoder.2 Linear(32,1): VPU multiply + sublane reduce (no M/N=1 matmul)
    y = jnp.sum(h3 * wq2, axis=0, keepdims=True) + bq2      # (1, TB), lane-dense

    out_ref[...] = y.astype(out_ref.dtype)


# -----------------------------------------------------------------------------
# Parameters
# -----------------------------------------------------------------------------
def init_params(key, input_dim, latent_dim=8, hidden=HIDDEN):
    """PyTorch-style init. Weights stored as (in, out) == torch_weight.T,
    biases as (1, out)."""

    def linear(k, fan_in, fan_out):
        kw, kb = jax.random.split(k)
        bound = 1.0 / (fan_in ** 0.5)
        w = jax.random.uniform(kw, (fan_in, fan_out), jnp.float32, -bound, bound)
        b = jax.random.uniform(kb, (1, fan_out), jnp.float32, -bound, bound)
        return w, b

    ks = jax.random.split(key, 6)
    we1, be1 = linear(ks[0], input_dim, hidden)       # encoder.0
    we2, be2 = linear(ks[1], hidden, latent_dim)      # encoder.2
    wd1, bd1 = linear(ks[2], latent_dim + 1, hidden)  # latent_dynamics.0
    wd2, bd2 = linear(ks[3], hidden, latent_dim)      # latent_dynamics.2
    wq1, bq1 = linear(ks[4], latent_dim, hidden)      # decoder.0
    wq2, bq2 = linear(ks[5], hidden, 1)               # decoder.2
    return dict(we1=we1, be1=be1, we2=we2, be2=be2, wd1=wd1, bd1=bd1,
                wd2=wd2, bd2=bd2, wq1=wq1, bq1=bq1, wq2=wq2, bq2=bq2)


def pack_params(p, input_dim, latent_dim=8, hidden=HIDDEN):
    """Build the fused, transposed kernel parameters.

    Exact algebraic reassociation: the Linear pairs with no nonlinearity
    between them are collapsed into single (32,32) matrices with folded biases.
    """
    idp = _round_up(input_dim, 8)

    wdz = p["wd1"][:latent_dim]                  # (LD, H)  dyn.0 z rows
    wdu = p["wd1"][latent_dim:latent_dim + 1]    # (1, H)   dyn.0 u row

    w_a = p["we2"] @ wdz                         # (H, H)
    b_a = p["be2"] @ wdz + p["bd1"]              # (1, H)
    w_b = p["wd2"] @ p["wq1"]                    # (H, H)
    b_b = p["bd2"] @ p["wq1"] + p["bq1"]         # (1, H)

    # Transposed layout: weights act from the left on (features, TB).
    w_e = jnp.pad(p["we1"].T, ((0, 0), (0, idp - input_dim)))   # (H, idp)

    vecs = jnp.concatenate([
        p["be1"].T,        # col 0
        b_a.T,             # col 1
        b_b.T,             # col 2
        wdu.T,             # col 3
        p["wq2"],          # col 4  (already (H, 1))
    ], axis=1)
    vecs = jnp.pad(vecs, ((0, 0), (0, 8 - vecs.shape[1])))       # (H, 8)

    return dict(w_e=w_e, w_a=w_a.T, w_b=w_b.T, vecs=vecs,
                bq2=p["bq2"].reshape(1, 1))


# -----------------------------------------------------------------------------
# Wrapper
# -----------------------------------------------------------------------------
def _choose_tile(B, idp, block_b):
    """Pick a lane tile (multiple of 128) under a simple VMEM budget."""
    bp128 = _round_up(B, 128)
    # Per-lane-column f32 bytes: double-buffered x^T/u^T/out blocks + ~6 (32,TB)
    # intermediates.  Budget ~24 MiB (fits every generation with a 32 MiB limit).
    per_lane = 4 * (2 * idp + 2 * 8 + 2 * 8 + 6 * 32)
    tb_cap = max(128, (24 * 1024 * 1024 // per_lane) // 128 * 128)
    tb = min(_round_up(min(block_b, B), 128), tb_cap)
    # If everything fits one tile but the batch is non-trivial, split into two
    # blocks so the "parallel" grid axis can feed both v7x TensorCores.
    if bp128 <= tb and bp128 >= 256:
        tb = _round_up(pl.cdiv(bp128, 2), 128)
    bp = _round_up(B, tb)
    return tb, bp


def latent_io_forward(packed, x, u=None, *, block_b=4096):
    """Pallas implementation of LatentIOModel.forward(x, u)."""
    B, input_dim = x.shape
    idp = packed["w_e"].shape[1]
    has_u = u is not None

    tb, bp = _choose_tile(B, idp, block_b)
    grid = (bp // tb,)

    # Batch-in-lanes layout: transpose + zero-pad wrapper-side.
    x_t = jnp.pad(x.T, ((0, idp - input_dim), (0, bp - B)))          # (idp, bp)
    if has_u:
        u_t = jnp.pad(u.reshape(-1)[None, :], ((0, 0), (0, bp - B)))  # (1, bp)

    kernel = functools.partial(_latent_io_kernel, has_u=has_u)

    def lane_spec(rows):
        return pl.BlockSpec((rows, tb), lambda i: (0, i))

    def resident(a):
        return pl.BlockSpec(a.shape, lambda i: (0, 0))

    args = [x_t]
    in_specs = [lane_spec(idp)]
    if has_u:
        args.append(u_t)
        in_specs.append(lane_spec(1))
    args += [packed["w_e"], packed["w_a"], packed["w_b"], packed["vecs"],
             packed["bq2"]]
    in_specs += [resident(packed["w_e"]), resident(packed["w_a"]),
                 resident(packed["w_b"]), resident(packed["vecs"]),
                 pl.BlockSpec(memory_space=pltpu.MemorySpace.SMEM)]

    out = pl.pallas_call(
        kernel,
        grid=grid,
        in_specs=in_specs,
        out_specs=lane_spec(1),
        out_shape=jax.ShapeDtypeStruct((1, bp), x.dtype),
        compiler_params=pltpu.CompilerParams(
            dimension_semantics=("parallel",),
            vmem_limit_bytes=32 * 1024 * 1024),
    )(*args)

    return out[0, :B].reshape(B, 1)


# -----------------------------------------------------------------------------
# Pure-JAX reference (mirrors the torch forward, incl. the real concat)
# -----------------------------------------------------------------------------
def latent_io_ref(p, x, u=None):
    B = x.shape[0]
    h1 = jnp.maximum(x @ p["we1"] + p["be1"], 0.0)
    z = h1 @ p["we2"] + p["be2"]
    uu = u if u is not None else jnp.zeros((B, 1), x.dtype)
    zu = jnp.concatenate([z, uu], axis=-1)
    h2 = jnp.tanh(zu @ p["wd1"] + p["bd1"])
    z2 = h2 @ p["wd2"] + p["bd2"]
    h3 = jnp.maximum(z2 @ p["wq1"] + p["bq1"], 0.0)
    return h3 @ p["wq2"] + p["bq2"]


if __name__ == "__main__":
    B, INPUT_DIM, LATENT_DIM = 8, 16, 8

    key = jax.random.PRNGKey(0)
    kp, kx, ku, kx2, ku2 = jax.random.split(key, 5)

    raw = init_params(kp, INPUT_DIM, LATENT_DIM)
    packed = pack_params(raw, INPUT_DIM, LATENT_DIM)

    x = jax.random.normal(kx, (B, INPUT_DIM), jnp.float32)
    u = jax.random.normal(ku, (B, 1), jnp.float32)

    # u provided / u = None (trace-time specialized variant)
    y_u = jax.block_until_ready(latent_io_forward(packed, x, u))
    y_none = jax.block_until_ready(latent_io_forward(packed, x, None))

    ref_u = latent_io_ref(raw, x, u)
    ref_none = latent_io_ref(raw, x, None)

    assert y_u.shape == (B, 1) and y_none.shape == (B, 1)
    # Fused weights are an exact algebraic reassociation; f32 rounding differs
    # slightly from the unfused reference, so tolerance is 1e-4.
    assert jnp.allclose(y_u, ref_u, atol=1e-4, rtol=1e-4)
    assert jnp.allclose(y_none, ref_none, atol=1e-4, rtol=1e-4)

    # Multi-block grid + batch-padding path (B not a multiple of the lane tile).
    B2 = 300
    x2 = jax.random.normal(kx2, (B2, INPUT_DIM), jnp.float32)
    u2 = jax.random.normal(ku2, (B2, 1), jnp.float32)
    y2 = jax.block_until_ready(latent_io_forward(packed, x2, u2, block_b=128))
    y2n = jax.block_until_ready(latent_io_forward(packed, x2, None, block_b=128))
    assert y2.shape == (B2, 1) and y2n.shape == (B2, 1)
    assert jnp.allclose(y2, latent_io_ref(raw, x2, u2), atol=1e-4, rtol=1e-4)
    assert jnp.allclose(y2n, latent_io_ref(raw, x2, None), atol=1e-4, rtol=1e-4)

    print("KERNEL_OK")
</pallas_src>

<mosaic_0001>
module attributes {stable_mosaic.version = 11 : i64} {
  func.func @_latent_io_kernel(%arg0: i32, %arg1: memref<16x128xf32, #tpu.memory_space<vmem>>, %arg2: memref<1x128xf32, #tpu.memory_space<vmem>>, %arg3: memref<32x16xf32, #tpu.memory_space<vmem>>, %arg4: memref<32x32xf32, #tpu.memory_space<vmem>>, %arg5: memref<32x32xf32, #tpu.memory_space<vmem>>, %arg6: memref<32x8xf32, #tpu.memory_space<vmem>>, %arg7: memref<1x1xf32, #tpu.memory_space<smem>>, %arg8: memref<1x128xf32, #tpu.memory_space<vmem>>) attributes {dimension_semantics = [#tpu.dimension_semantics<parallel>], iteration_bounds = array<i64: 1>, scalar_prefetch = 0 : i64, scratch_operands = 0 : i64, tpu.core_type = #tpu.core_type<tc>, window_params = [{transform_indices = @transform_0, window_bounds = array<i64: 16, 128>}, {transform_indices = @transform_1, window_bounds = array<i64: 1, 128>}, {pipeline_mode = #tpu.pipeline_mode<synchronous>, transform_indices = @transform_2, window_bounds = array<i64: 32, 16>}, {pipeline_mode = #tpu.pipeline_mode<synchronous>, transform_indices = @transform_3, window_bounds = array<i64: 32, 32>}, {pipeline_mode = #tpu.pipeline_mode<synchronous>, transform_indices = @transform_4, window_bounds = array<i64: 32, 32>}, {pipeline_mode = #tpu.pipeline_mode<synchronous>, transform_indices = @transform_5, window_bounds = array<i64: 32, 8>}, {transform_indices = @transform_6, window_bounds = array<i64: 1, 1>}, {transform_indices = @transform_7, window_bounds = array<i64: 1, 128>}]} {
    %c0 = arith.constant 0 : index
    %c0_0 = arith.constant 0 : index
    %0 = vector.load %arg1[%c0, %c0_0] : memref<16x128xf32, #tpu.memory_space<vmem>>, vector<16x128xf32>
    %c0_1 = arith.constant 0 : index
    %c0_2 = arith.constant 0 : index
    %1 = vector.load %arg3[%c0_1, %c0_2] : memref<32x16xf32, #tpu.memory_space<vmem>>, vector<32x16xf32>
    %c0_3 = arith.constant 0 : index
    %c0_4 = arith.constant 0 : index
    %2 = vector.load %arg4[%c0_3, %c0_4] : memref<32x32xf32, #tpu.memory_space<vmem>>, vector<32x32xf32>
    %c0_5 = arith.constant 0 : index
    %c0_6 = arith.constant 0 : index
    %3 = vector.load %arg5[%c0_5, %c0_6] : memref<32x32xf32, #tpu.memory_space<vmem>>, vector<32x32xf32>
    %c0_7 = arith.constant 0 : index
    %c0_8 = arith.constant 0 : index
    %4 = vector.load %arg6[%c0_7, %c0_8] : memref<32x8xf32, #tpu.memory_space<vmem>>, vector<32x8xf32>
    %5 = vector.extract_strided_slice %4 {offsets = [0, 0], sizes = [32, 1], strides = [1, 1]} : vector<32x8xf32> to vector<32x1xf32>
    %6 = vector.extract_strided_slice %4 {offsets = [0, 1], sizes = [32, 1], strides = [1, 1]} : vector<32x8xf32> to vector<32x1xf32>
    %7 = vector.extract_strided_slice %4 {offsets = [0, 2], sizes = [32, 1], strides = [1, 1]} : vector<32x8xf32> to vector<32x1xf32>
    %8 = vector.extract_strided_slice %4 {offsets = [0, 3], sizes = [32, 1], strides = [1, 1]} : vector<32x8xf32> to vector<32x1xf32>
    %9 = vector.extract_strided_slice %4 {offsets = [0, 4], sizes = [32, 1], strides = [1, 1]} : vector<32x8xf32> to vector<32x1xf32>
    %c0_9 = arith.constant 0 : index
    %c0_10 = arith.constant 0 : index
    %10 = memref.load %arg7[%c0_9, %c0_10] : memref<1x1xf32, #tpu.memory_space<smem>>
    %cst = arith.constant dense<0.000000e+00> : vector<32x128xf32>
    %11 = tpu.matmul %1, %0, %cst {dimension_numbers = #tpu.dot_dimension_numbers<[1], [0], [0], [1], [0, 0, 1, 1], [], []>} : vector<32x16xf32>, vector<16x128xf32>, vector<32x128xf32> -> vector<32x128xf32>
    %12 = vector.broadcast %5 : vector<32x1xf32> to vector<32x128xf32>
    %13 = arith.addf %11, %12 : vector<32x128xf32>
    %cst_11 = arith.constant 0.000000e+00 : f32
    %14 = vector.broadcast %cst_11 : f32 to vector<32x128xf32>
    %15 = arith.maximumf %13, %14 : vector<32x128xf32>
    %cst_12 = arith.constant dense<0.000000e+00> : vector<32x128xf32>
    %16 = tpu.matmul %2, %15, %cst_12 {dimension_numbers = #tpu.dot_dimension_numbers<[1], [0], [0], [1], [0, 0, 1, 1], [], []>} : vector<32x32xf32>, vector<32x128xf32>, vector<32x128xf32> -> vector<32x128xf32>
    %17 = vector.broadcast %6 : vector<32x1xf32> to vector<32x128xf32>
    %18 = arith.addf %16, %17 : vector<32x128xf32>
    %c0_13 = arith.constant 0 : index
    %c0_14 = arith.constant 0 : index
    %19 = vector.load %arg2[%c0_13, %c0_14] : memref<1x128xf32, #tpu.memory_space<vmem>>, vector<1x128xf32>
    %20 = vector.broadcast %8 : vector<32x1xf32> to vector<32x128xf32>
    %21 = vector.broadcast %19 : vector<1x128xf32> to vector<32x128xf32>
    %22 = arith.mulf %20, %21 : vector<32x128xf32>
    %23 = arith.addf %18, %22 : vector<32x128xf32>
    %24 = math.tanh %23 : vector<32x128xf32>
    %cst_15 = arith.constant dense<0.000000e+00> : vector<32x128xf32>
    %25 = tpu.matmul %3, %24, %cst_15 {dimension_numbers = #tpu.dot_dimension_numbers<[1], [0], [0], [1], [0, 0, 1, 1], [], []>} : vector<32x32xf32>, vector<32x128xf32>, vector<32x128xf32> -> vector<32x128xf32>
    %26 = vector.broadcast %7 : vector<32x1xf32> to vector<32x128xf32>
    %27 = arith.addf %25, %26 : vector<32x128xf32>
    %cst_16 = arith.constant 0.000000e+00 : f32
    %28 = vector.broadcast %cst_16 : f32 to vector<32x128xf32>
    %29 = arith.maximumf %27, %28 : vector<32x128xf32>
    %30 = vector.broadcast %9 : vector<32x1xf32> to vector<32x128xf32>
    %31 = arith.mulf %29, %30 : vector<32x128xf32>
    %cst_17 = arith.constant dense<0.000000e+00> : vector<128xf32>
    %32 = vector.multi_reduction <add>, %31, %cst_17 [0] : vector<32x128xf32> to vector<128xf32>
    %33 = vector.shape_cast %32 : vector<128xf32> to vector<1x128xf32>
    %34 = vector.broadcast %10 : f32 to vector<1x128xf32>
    %35 = arith.addf %33, %34 : vector<1x128xf32>
    %c0_18 = arith.constant 0 : index
    %c0_19 = arith.constant 0 : index
    %36 = vector.load %arg8[%c0_18, %c0_19] : memref<1x128xf32, #tpu.memory_space<vmem>>, vector<1x128xf32>
    tpu.vector_store %arg8[%c0_18, %c0_19], %35 {strides = array<i32>} : memref<1x128xf32, #tpu.memory_space<vmem>>, vector<1x128xf32>,
    return
  }
  func.func @transform_0(%arg0: i32) -> (i32, i32) {
    %c0_i32 = arith.constant 0 : i32
    %c0_i32_0 = arith.constant 0 : i32
    return %c0_i32, %arg0 : i32, i32
  }
  func.func @transform_1(%arg0: i32) -> (i32, i32) {
    %c0_i32 = arith.constant 0 : i32
    %c0_i32_0 = arith.constant 0 : i32
    return %c0_i32, %arg0 : i32, i32
  }
  func.func @transform_2(%arg0: i32) -> (i32, i32) {
    %c0_i32 = arith.constant 0 : i32
    %c0_i32_0 = arith.constant 0 : i32
    %c0_i32_1 = arith.constant 0 : i32
    return %c0_i32, %c0_i32_0 : i32, i32
  }
  func.func @transform_3(%arg0: i32) -> (i32, i32) {
    %c0_i32 = arith.constant 0 : i32
    %c0_i32_0 = arith.constant 0 : i32
    %c0_i32_1 = arith.constant 0 : i32
    return %c0_i32, %c0_i32_0 : i32, i32
  }
  func.func @transform_4(%arg0: i32) -> (i32, i32) {
    %c0_i32 = arith.constant 0 : i32
    %c0_i32_0 = arith.constant 0 : i32
    %c0_i32_1 = arith.constant 0 : i32
    return %c0_i32, %c0_i32_0 : i32, i32
  }
  func.func @transform_5(%arg0: i32) -> (i32, i32) {
    %c0_i32 = arith.constant 0 : i32
    %c0_i32_0 = arith.constant 0 : i32
    %c0_i32_1 = arith.constant 0 : i32
    return %c0_i32, %c0_i32_0 : i32, i32
  }
  func.func @transform_6(%arg0: i32) -> (i32, i32) {
    %c0_i32 = arith.constant 0 : i32
    %c0_i32_0 = arith.constant 0 : i32
    %c0_i32_1 = arith.constant 0 : i32
    return %c0_i32, %c0_i32_0 : i32, i32
  }
  func.func @transform_7(%arg0: i32) -> (i32, i32) {
    %c0_i32 = arith.constant 0 : i32
    %c0_i32_0 = arith.constant 0 : i32
    return %c0_i32, %arg0 : i32, i32
  }
}

</mosaic_0001>

<llo_original>
// kernel: tpu_custom_call.1
$region0: #{tpu_custom_call.1}
  #allocation0 [shape = 'u32[]', space=smem, size = 0x4, offset = 0x4, fixed_abs, tag = 'smem constant byte address 0x4 - core index']
  #allocation1 [shape = 'u32[144,128]{1,0:T(1,128)}', space=vmem, size = 0x12000, scoped, tag = 'internal scratch']
  #allocation2 [shape = 'f32[1,1]{1,0:T(1,128)S(6)}', space=smem, size = 0x200, scoped, tag = 'scoped memory for tpu_custom_call.1']
  %s0 = inlined_call_operand.vmem [shape: f32[16,128], index: 0, kind: input, shape index: {}]
  %s1 = inlined_call_operand.vmem [shape: f32[1,128], index: 1, kind: input, shape index: {}]
  %s2 = inlined_call_operand.vmem [shape: f32[32,16], index: 2, kind: input, shape index: {}]
  %s3 = inlined_call_operand.vmem [shape: f32[32,32], index: 3, kind: input, shape index: {}]
  %s4 = inlined_call_operand.vmem [shape: f32[32,32], index: 4, kind: input, shape index: {}]
  %s5 = inlined_call_operand.vmem [shape: f32[32,8], index: 5, kind: input, shape index: {}]
  %s6 = inlined_call_operand.<no memory space> [shape: f32[1,1], index: 6, kind: input, shape index: {}]
  %s7 = inlined_call_operand.hbm [shape: f32[1,128], index: 7, kind: output, shape index: {}]
  %s8 = sld [smem:[#allocation0]]
  $region38: #{tpu_custom_call.1} parent=0
    _
  %s10 = ssub.s32 1, %s8
  %s11 = scalar_select 0, %s10, %s8
  %12 = sst [smem:[#allocation2]] %s6
  $region1: #{tpu_custom_call.1} parent=0
    #allocation3 [shape = 'u8[512]{0}', space=vmem, size = 0x400, scoped, tag = 'output window, operand 0, single buffered']
    #allocation4 [shape = 's32[1]{0}', space=sflag, size = 0x4, scoped, tag = 'scoped memory for tpu_custom_call.1']
    %13 = vsyncpa [#allocation4], 0
    // Predicated region
    $region2: #{tpu_custom_call.1} parent=1 // pred_check
      _
    $region3: #{tpu_custom_call.1} parent=1 // pred_check_branch
      %15 = sbr.rel (0) target = $region5
    $region4: #{tpu_custom_call.1} parent=1 // pred_region
      _
    $region5: #{tpu_custom_call.1} parent=1 // pred_fallthru
      _
    // Predicated region
    $region6: #{tpu_custom_call.1} parent=1 // pred_check
      _
    $region7: #{tpu_custom_call.1} parent=1 // pred_check_branch
      %17 = sbr.rel (0) target = $region9
    $region8: #{tpu_custom_call.1} parent=1 // pred_region
      _
    $region9: #{tpu_custom_call.1} parent=1 // pred_fallthru
      _
    // Predicated region
    $region10: #{tpu_custom_call.1} parent=1 // pred_check
      _
    $region11: #{tpu_custom_call.1} parent=1 // pred_check_branch
      %19 = sbr.rel (0) target = $region13
    $region12: #{tpu_custom_call.1} parent=1 // pred_region
      _
    $region13: #{tpu_custom_call.1} parent=1 // pred_fallthru
      _
    // Predicated region
    $region14: #{tpu_custom_call.1} parent=1 // pred_check
      _
    $region15: #{tpu_custom_call.1} parent=1 // pred_check_branch
      %21 = sbr.rel (0) target = $region17
    $region16: #{tpu_custom_call.1} parent=1 // pred_region
      _
    $region17: #{tpu_custom_call.1} parent=1 // pred_fallthru
      _
    // Predicated region
    $region18: #{tpu_custom_call.1} parent=1 // pred_check
      _
    $region19: #{tpu_custom_call.1} parent=1 // pred_check_branch
      %23 = sbr.rel (0) target = $region21
    $region20: #{tpu_custom_call.1} parent=1 // pred_region
      _
    $region21: #{tpu_custom_call.1} parent=1 // pred_fallthru
      _
    // Predicated region
    $region22: #{tpu_custom_call.1} parent=1 // pred_check
      _
    $region23: #{tpu_custom_call.1} parent=1 // pred_check_branch
      %25 = sbr.rel (0) target = $region25
    $region24: #{tpu_custom_call.1} parent=1 // pred_region
      _
    $region25: #{tpu_custom_call.1} parent=1 // pred_fallthru
      _
    // Predicated region
    $region26: #{tpu_custom_call.1} parent=1 // pred_check
      _
    $region27: #{tpu_custom_call.1} parent=1 // pred_check_branch
      %27 = sbr.rel (0) target = $region29
    $region28: #{tpu_custom_call.1} parent=1 // pred_region
      _
    $region29: #{tpu_custom_call.1} parent=1 // pred_fallthru
      _
    %v28 = vld [vmem:[%s0] sm:$0xff]
    %v29 = vld [vmem:[%s0 + $0x8] sm:$0xff]
    %v30 = vld [vmem:[%s2] sm:$0xff]
    %v31 = vld [vmem:[%s2 + $0x8] sm:$0xff]
    %v32 = vld [vmem:[%s2 + $0x10] sm:$0xff]
    %v33 = vld [vmem:[%s2 + $0x18] sm:$0xff]
    %v34 = vld [vmem:[%s3] sm:$0xff]
    %v35 = vld [vmem:[%s3 + $0x8] sm:$0xff]
    %v36 = vld [vmem:[%s3 + $0x10] sm:$0xff]
    %v37 = vld [vmem:[%s3 + $0x18] sm:$0xff]
    %v38 = vld [vmem:[%s4] sm:$0xff]
    %v39 = vld [vmem:[%s4 + $0x8] sm:$0xff]
    %v40 = vld [vmem:[%s4 + $0x10] sm:$0xff]
    %v41 = vld [vmem:[%s4 + $0x18] sm:$0xff]
    %v42 = vld [vmem:[%s5] sm:$0xff]
    %v43 = vld [vmem:[%s5 + $0x8] sm:$0xff]
    %v44 = vld [vmem:[%s5 + $0x10] sm:$0xff]
    %v45 = vld [vmem:[%s5 + $0x18] sm:$0xff]
    %s46 = sld [smem:[#allocation2]]
    %48 = vset.pattern.permute.xlu0 0
    %49 = vperm.xlu0 %48, %v42
    %v50 = vpop.permute.xlu0 %49
    %53 = vset.pattern.permute.xlu0 0
    %54 = vperm.xlu0 %53, %v43
    %v55 = vpop.permute.xlu0 %54
    %58 = vset.pattern.permute.xlu0 0
    %59 = vperm.xlu0 %58, %v44
    %v60 = vpop.permute.xlu0 %59
    %63 = vset.pattern.permute.xlu0 0
    %64 = vperm.xlu0 %63, %v45
    %v65 = vpop.permute.xlu0 %64
    %vm67 = vcmask 130048
    %v69 = vsel %vm67, %v30, 0
    %v72 = vsel %vm67, %v31, 0
    %v75 = vsel %vm67, %v32, 0
    %v78 = vsel %vm67, %v33, 0
    %80 = vmatprep.subr.mxu0 0.0
    %81 = vmatpush1.msra.mxu0 %v28
    %82 = vmatprep.subr.mxu0 0.0
    %83 = vmatpush1.msra.mxu0 %v29
    %84 = vmatprep.subr.mxu0 0.0
    %85 = vmatpush1.msra.mxu0 0.0
    %86 = vmatprep.subr.mxu0 0.0
    %87 = vmatpush1.msra.mxu0 0.0
    %88 = vmatprep.subr.mxu0 0.0
    %89 = vmatpush1.msra.mxu0 0.0
    %90 = vmatprep.subr.mxu0 0.0
    %91 = vmatpush1.msra.mxu0 0.0
    %92 = vmatprep.subr.mxu0 0.0
    %93 = vmatpush1.msra.mxu0 0.0
    %94 = vmatprep.subr.mxu0 0.0
    %95 = vmatpush1.msra.mxu0 0.0
    %96 = vmatprep.subr.mxu0 0.0
    %97 = vmatpush1.msra.mxu0 0.0
    %98 = vmatprep.subr.mxu0 0.0
    %99 = vmatpush1.msra.mxu0 0.0
    %100 = vmatprep.subr.mxu0 0.0
    %101 = vmatpush1.msra.mxu0 0.0
    %102 = vmatprep.subr.mxu0 0.0
    %103 = vmatpush1.msra.mxu0 0.0
    %104 = vmatprep.subr.mxu0 0.0
    %105 = vmatpush1.msra.mxu0 0.0
    %106 = vmatprep.subr.mxu0 0.0
    %107 = vmatpush1.msra.mxu0 0.0
    %108 = vmatprep.subr.mxu0 0.0
    %109 = vmatpush1.msra.mxu0 0.0
    %110 = vmatprep.subr.mxu0 0.0
    %111 = vmatpush1.msra.mxu0 0.0
    %112 = vmatprep.subr.mxu0 0.0
    %113 = vmatpush1.msra.mxu0 0.0
    %114 = vmatprep.subr.mxu0 0.0
    %115 = vmatpush1.msra.mxu0 0.0
    %116 = vmatprep.subr.mxu0 0.0
    %117 = vmatpush1.msra.mxu0 0.0
    %118 = vmatprep.subr.mxu0 0.0
    %119 = vmatpush1.msra.mxu0 0.0
    %120 = vmatprep.subr.mxu0 0.0
    %121 = vmatpush1.msra.mxu0 0.0
    %122 = vmatprep.subr.mxu0 0.0
    %123 = vmatpush1.msra.mxu0 0.0
    %124 = vmatprep.subr.mxu0 0.0
    %125 = vmatpush1.msra.mxu0 0.0
    %126 = vmatprep.subr.mxu0 0.0
    %127 = vmatpush1.msra.mxu0 0.0
    %128 = vmatprep.subr.mxu0 0.0
    %129 = vmatpush1.msra.mxu0 0.0
    %130 = vmatprep.subr.mxu0 0.0
    %131 = vmatpush1.msra.mxu0 0.0
    %132 = vmatprep.subr.mxu0 0.0
    %133 = vmatpush1.msra.mxu0 0.0
    %134 = vmatprep.subr.mxu0 0.0
    %135 = vmatpush1.msra.mxu0 0.0
    %136 = vmatprep.subr.mxu0 0.0
    %137 = vmatpush1.msra.mxu0 0.0
    %138 = vmatprep.subr.mxu0 0.0
    %139 = vmatpush1.msra.mxu0 0.0
    %140 = vmatprep.subr.mxu0 0.0
    %141 = vmatpush1.msra.mxu0 0.0
    %142 = vmatprep.subr.mxu0 0.0
    %143 = vmatpush1.msra.mxu0 0.0
    %144 = vmatprep.mubr.f32.mxu0 0.0
    %145 = vmatmul.mubr.f32.gmra.mrb[0].mxu0 %v69
    %v146 = vpop.f32.mrb[0].mxu0
    %v147 = vadd.f32 %v50, %v146
    %v148 = vpop.f32.mrb[0].mxu0
    %149 = vmatprep.mubr.f32.mxu0 0.0
    %150 = vmatmul.mubr.f32.gmra.mrb[0].mxu0 %v72
    %v151 = vpop.f32.mrb[0].mxu0
    %v152 = vadd.f32 %v55, %v151
    %v153 = vpop.f32.mrb[0].mxu0
    %154 = vmatprep.mubr.f32.mxu0 0.0
    %155 = vmatmul.mubr.f32.gmra.mrb[0].mxu0 %v75
    %v156 = vpop.f32.mrb[0].mxu0
    %v157 = vadd.f32 %v60, %v156
    %v158 = vpop.f32.mrb[0].mxu0
    %159 = vmatprep.mubr.f32.mxu0 0.0
    %160 = vmatmul.mubr.f32.gmra.mrb[0].mxu0 %v78
    %v161 = vpop.f32.mrb[0].mxu0
    %v162 = vadd.f32 %v65, %v161
    %v163 = vpop.f32.mrb[0].mxu0
    %164 = vdwg.mxu0
    %v165 = vmax.f32 %v147, 0.0
    %v166 = vmax.f32 %v152, 0.0
    %v167 = vmax.f32 %v157, 0.0
    %v168 = vmax.f32 %v162, 0.0
    %169 = vset.pattern.permute.xlu0 1
    %170 = vperm.xlu0 %169, %v42
    %v171 = vpop.permute.xlu0 %170
    %173 = vset.pattern.permute.xlu0 1
    %174 = vperm.xlu0 %173, %v43
    %v175 = vpop.permute.xlu0 %174
    %177 = vset.pattern.permute.xlu0 1
    %178 = vperm.xlu0 %177, %v44
    %v179 = vpop.permute.xlu0 %178
    %181 = vset.pattern.permute.xlu0 1
    %182 = vperm.xlu0 %181, %v45
    %v183 = vpop.permute.xlu0 %182
    %vm185 = vcmask 261120
    %v187 = vsel %vm185, %v34, 0
    %v190 = vsel %vm185, %v35, 0
    %v193 = vsel %vm185, %v36, 0
    %v196 = vsel %vm185, %v37, 0
    %198 = vmatprep.subr.mxu0 0.0
    %199 = vmatpush1.msra.mxu0 %v165
    %200 = vmatprep.subr.mxu0 0.0
    %201 = vmatpush1.msra.mxu0 %v166
    %202 = vmatprep.subr.mxu0 0.0
    %203 = vmatpush1.msra.mxu0 %v167
    %204 = vmatprep.subr.mxu0 0.0
    %205 = vmatpush1.msra.mxu0 %v168
    %206 = vmatprep.subr.mxu0 0.0
    %207 = vmatpush1.msra.mxu0 0.0
    %208 = vmatprep.subr.mxu0 0.0
    %209 = vmatpush1.msra.mxu0 0.0
    %210 = vmatprep.subr.mxu0 0.0
    %211 = vmatpush1.msra.mxu0 0.0
    %212 = vmatprep.subr.mxu0 0.0
    %213 = vmatpush1.msra.mxu0 0.0
    %214 = vmatprep.subr.mxu0 0.0
    %215 = vmatpush1.msra.mxu0 0.0
    %216 = vmatprep.subr.mxu0 0.0
    %217 = vmatpush1.msra.mxu0 0.0
    %218 = vmatprep.subr.mxu0 0.0
    %219 = vmatpush1.msra.mxu0 0.0
    %220 = vmatprep.subr.mxu0 0.0
    %221 = vmatpush1.msra.mxu0 0.0
    %222 = vmatprep.subr.mxu0 0.0
    %223 = vmatpush1.msra.mxu0 0.0
    %224 = vmatprep.subr.mxu0 0.0
    %225 = vmatpush1.msra.mxu0 0.0
    %226 = vmatprep.subr.mxu0 0.0
    %227 = vmatpush1.msra.mxu0 0.0
    %228 = vmatprep.subr.mxu0 0.0
    %229 = vmatpush1.msra.mxu0 0.0
    %230 = vmatprep.subr.mxu0 0.0
    %231 = vmatpush1.msra.mxu0 0.0
    %232 = vmatprep.subr.mxu0 0.0
    %233 = vmatpush1.msra.mxu0 0.0
    %234 = vmatprep.subr.mxu0 0.0
    %235 = vmatpush1.msra.mxu0 0.0
    %236 = vmatprep.subr.mxu0 0.0
    %237 = vmatpush1.msra.mxu0 0.0
    %238 = vmatprep.subr.mxu0 0.0
    %239 = vmatpush1.msra.mxu0 0.0
    %240 = vmatprep.subr.mxu0 0.0
    %241 = vmatpush1.msra.mxu0 0.0
    %242 = vmatprep.subr.mxu0 0.0
    %243 = vmatpush1.msra.mxu0 0.0
    %244 = vmatprep.subr.mxu0 0.0
    %245 = vmatpush1.msra.mxu0 0.0
    %246 = vmatprep.subr.mxu0 0.0
    %247 = vmatpush1.msra.mxu0 0.0
    %248 = vmatprep.subr.mxu0 0.0
    %249 = vmatpush1.msra.mxu0 0.0
    %250 = vmatprep.subr.mxu0 0.0
    %251 = vmatpush1.msra.mxu0 0.0
    %252 = vmatprep.subr.mxu0 0.0
    %253 = vmatpush1.msra.mxu0 0.0
    %254 = vmatprep.subr.mxu0 0.0
    %255 = vmatpush1.msra.mxu0 0.0
    %256 = vmatprep.subr.mxu0 0.0
    %257 = vmatpush1.msra.mxu0 0.0
    %258 = vmatprep.subr.mxu0 0.0
    %259 = vmatpush1.msra.mxu0 0.0
    %260 = vmatprep.subr.mxu0 0.0
    %261 = vmatpush1.msra.mxu0 0.0
    %262 = vmatprep.mubr.f32.mxu0 0.0
    %263 = vmatmul.mubr.f32.gmra.mrb[0].mxu0 %v187
    %v264 = vpop.f32.mrb[0].mxu0
    %v265 = vadd.f32 %v171, %v264
    %v266 = vpop.f32.mrb[0].mxu0
    %267 = vmatprep.mubr.f32.mxu0 0.0
    %268 = vmatmul.mubr.f32.gmra.mrb[0].mxu0 %v190
    %v269 = vpop.f32.mrb[0].mxu0
    %v270 = vadd.f32 %v175, %v269
    %v271 = vpop.f32.mrb[0].mxu0
    %272 = vmatprep.mubr.f32.mxu0 0.0
    %273 = vmatmul.mubr.f32.gmra.mrb[0].mxu0 %v193
    %v274 = vpop.f32.mrb[0].mxu0
    %v275 = vadd.f32 %v179, %v274
    %v276 = vpop.f32.mrb[0].mxu0
    %277 = vmatprep.mubr.f32.mxu0 0.0
    %278 = vmatmul.mubr.f32.gmra.mrb[0].mxu0 %v196
    %v279 = vpop.f32.mrb[0].mxu0
    %v280 = vadd.f32 %v183, %v279
    %v281 = vpop.f32.mrb[0].mxu0
    %282 = vdwg.mxu0
    %v283 = vld [vmem:[%s1] sm:$0x1]
    %284 = vset.pattern.permute.xlu0 3
    %285 = vperm.xlu0 %284, %v42
    %v286 = vpop.permute.xlu0 %285
    %288 = vset.pattern.permute.xlu0 3
    %289 = vperm.xlu0 %288, %v43
    %v290 = vpop.permute.xlu0 %289
    %292 = vset.pattern.permute.xlu0 3
    %293 = vperm.xlu0 %292, %v44
    %v294 = vpop.permute.xlu0 %293
    %296 = vset.pattern.permute.xlu0 3
    %297 = vperm.xlu0 %296, %v45
    %v298 = vpop.permute.xlu0 %297
    %v301 = vlaneseq
    %v302 = vshrl.u32 %v301, 7
    %v303 = vsub.s32 0, %v302
    %v304 = vrot.slane %v283, %v303
    %v306 = vmul.f32 %v286, %v304
    %v307 = vmul.f32 %v290, %v304
    %v308 = vmul.f32 %v294, %v304
    %v309 = vmul.f32 %v298, %v304
    %v310 = vadd.f32 %v265, %v306
    %v311 = vadd.f32 %v270, %v307
    %v312 = vadd.f32 %v275, %v308
    %v313 = vadd.f32 %v280, %v309
    %v314 = vtanh.pop %v310
    %v315 = vtanh.pop %v311
    %v316 = vtanh.pop %v312
    %v317 = vtanh.pop %v313
    %318 = vset.pattern.permute.xlu0 2
    %319 = vperm.xlu0 %318, %v42
    %v320 = vpop.permute.xlu0 %319
    %322 = vset.pattern.permute.xlu0 2
    %323 = vperm.xlu0 %322, %v43
    %v324 = vpop.permute.xlu0 %323
    %326 = vset.pattern.permute.xlu0 2
    %327 = vperm.xlu0 %326, %v44
    %v328 = vpop.permute.xlu0 %327
    %330 = vset.pattern.permute.xlu0 2
    %331 = vperm.xlu0 %330, %v45
    %v332 = vpop.permute.xlu0 %331
    %v335 = vsel %vm185, %v38, 0
    %v338 = vsel %vm185, %v39, 0
    %v341 = vsel %vm185, %v40, 0
    %v344 = vsel %vm185, %v41, 0
    %346 = vmatprep.subr.mxu0 0.0
    %347 = vmatpush1.msra.mxu0 %v314
    %348 = vmatprep.subr.mxu0 0.0
    %349 = vmatpush1.msra.mxu0 %v315
    %350 = vmatprep.subr.mxu0 0.0
    %351 = vmatpush1.msra.mxu0 %v316
    %352 = vmatprep.subr.mxu0 0.0
    %353 = vmatpush1.msra.mxu0 %v317
    %354 = vmatprep.subr.mxu0 0.0
    %355 = vmatpush1.msra.mxu0 0.0
    %356 = vmatprep.subr.mxu0 0.0
    %357 = vmatpush1.msra.mxu0 0.0
    %358 = vmatprep.subr.mxu0 0.0
    %359 = vmatpush1.msra.mxu0 0.0
    %360 = vmatprep.subr.mxu0 0.0
    %361 = vmatpush1.msra.mxu0 0.0
    %362 = vmatprep.subr.mxu0 0.0
    %363 = vmatpush1.msra.mxu0 0.0
    %364 = vmatprep.subr.mxu0 0.0
    %365 = vmatpush1.msra.mxu0 0.0
    %366 = vmatprep.subr.mxu0 0.0
    %367 = vmatpush1.msra.mxu0 0.0
    %368 = vmatprep.subr.mxu0 0.0
    %369 = vmatpush1.msra.mxu0 0.0
    %370 = vmatprep.subr.mxu0 0.0
    %371 = vmatpush1.msra.mxu0 0.0
    %372 = vmatprep.subr.mxu0 0.0
    %373 = vmatpush1.msra.mxu0 0.0
    %374 = vmatprep.subr.mxu0 0.0
    %375 = vmatpush1.msra.mxu0 0.0
    %376 = vmatprep.subr.mxu0 0.0
    %377 = vmatpush1.msra.mxu0 0.0
    %378 = vmatprep.subr.mxu0 0.0
    %379 = vmatpush1.msra.mxu0 0.0
    %380 = vmatprep.subr.mxu0 0.0
    %381 = vmatpush1.msra.mxu0 0.0
    %382 = vmatprep.subr.mxu0 0.0
    %383 = vmatpush1.msra.mxu0 0.0
    %384 = vmatprep.subr.mxu0 0.0
    %385 = vmatpush1.msra.mxu0 0.0
    %386 = vmatprep.subr.mxu0 0.0
    %387 = vmatpush1.msra.mxu0 0.0
    %388 = vmatprep.subr.mxu0 0.0
    %389 = vmatpush1.msra.mxu0 0.0
    %390 = vmatprep.subr.mxu0 0.0
    %391 = vmatpush1.msra.mxu0 0.0
    %392 = vmatprep.subr.mxu0 0.0
    %393 = vmatpush1.msra.mxu0 0.0
    %394 = vmatprep.subr.mxu0 0.0
    %395 = vmatpush1.msra.mxu0 0.0
    %396 = vmatprep.subr.mxu0 0.0
    %397 = vmatpush1.msra.mxu0 0.0
    %398 = vmatprep.subr.mxu0 0.0
    %399 = vmatpush1.msra.mxu0 0.0
    %400 = vmatprep.subr.mxu0 0.0
    %401 = vmatpush1.msra.mxu0 0.0
    %402 = vmatprep.subr.mxu0 0.0
    %403 = vmatpush1.msra.mxu0 0.0
    %404 = vmatprep.subr.mxu0 0.0
    %405 = vmatpush1.msra.mxu0 0.0
    %406 = vmatprep.subr.mxu0 0.0
    %407 = vmatpush1.msra.mxu0 0.0
    %408 = vmatprep.subr.mxu0 0.0
    %409 = vmatpush1.msra.mxu0 0.0
    %410 = vmatprep.mubr.f32.mxu0 0.0
    %411 = vmatmul.mubr.f32.gmra.mrb[0].mxu0 %v335
    %v412 = vpop.f32.mrb[0].mxu0
    %v413 = vadd.f32 %v320, %v412
    %v414 = vpop.f32.mrb[0].mxu0
    %415 = vmatprep.mubr.f32.mxu0 0.0
    %416 = vmatmul.mubr.f32.gmra.mrb[0].mxu0 %v338
    %v417 = vpop.f32.mrb[0].mxu0
    %v418 = vadd.f32 %v324, %v417
    %v419 = vpop.f32.mrb[0].mxu0
    %420 = vmatprep.mubr.f32.mxu0 0.0
    %421 = vmatmul.mubr.f32.gmra.mrb[0].mxu0 %v341
    %v422 = vpop.f32.mrb[0].mxu0
    %v423 = vadd.f32 %v328, %v422
    %v424 = vpop.f32.mrb[0].mxu0
    %425 = vmatprep.mubr.f32.mxu0 0.0
    %426 = vmatmul.mubr.f32.gmra.mrb[0].mxu0 %v344
    %v427 = vpop.f32.mrb[0].mxu0
    %v428 = vadd.f32 %v332, %v427
    %v429 = vpop.f32.mrb[0].mxu0
    %430 = vdwg.mxu0
    %v431 = vmax.f32 %v413, 0.0
    %v432 = vmax.f32 %v418, 0.0
    %v433 = vmax.f32 %v423, 0.0
    %v434 = vmax.f32 %v428, 0.0
    %435 = vset.pattern.permute.xlu0 4
    %436 = vperm.xlu0 %435, %v42
    %v437 = vpop.permute.xlu0 %436
    %439 = vset.pattern.permute.xlu0 4
    %440 = vperm.xlu0 %439, %v43
    %v441 = vpop.permute.xlu0 %440
    %443 = vset.pattern.permute.xlu0 4
    %444 = vperm.xlu0 %443, %v44
    %v445 = vpop.permute.xlu0 %444
    %447 = vset.pattern.permute.xlu0 4
    %448 = vperm.xlu0 %447, %v45
    %v449 = vpop.permute.xlu0 %448
    %v451 = vmul.f32 %v431, %v437
    %v452 = vmul.f32 %v432, %v441
    %v453 = vmul.f32 %v433, %v445
    %v454 = vmul.f32 %v434, %v449
    %v455 = vadd.f32 %v451, %v452
    %v456 = vadd.f32 %v455, %v453
    %v457 = vadd.f32 %v456, %v454
    %v458 = vrot.slane %v457, 4
    %v459 = vadd.f32 %v457, %v458
    %v460 = vrot.slane %v459, 2
    %v461 = vadd.f32 %v459, %v460
    %v462 = vrot.slane %v461, 1
    %v463 = vadd.f32 %v461, %v462
    %v464 = vstv %s46
    %v465 = vadd.f32 %v463, %v464
    %466 = vst [vmem:[#allocation3] sm:$0x1] %v465
    // Predicated region
    $region30: #{tpu_custom_call.1} parent=1 // pred_check
      _
    $region31: #{tpu_custom_call.1} parent=1 // pred_check_branch
      %468 = sbr.rel (0) target = $region33
    $region32: #{tpu_custom_call.1} parent=1 // pred_region
      %s470 = ssub.s32 16, 16
      %471 = vsyncadd [#allocation4], %s470
      %s473 = sshll.u32 [#allocation3], 4
      %s474 = int_to_ptr.vmem [resolvable:$true] %s473
      %476 = dma.vmem_to_hbm [thread:$0]  %s474, 16, %s7, [#allocation4]
    $region33: #{tpu_custom_call.1} parent=1 // pred_fallthru
      _
    // Predicated region
    $region34: #{tpu_custom_call.1} parent=1 // pred_check
      _
    $region35: #{tpu_custom_call.1} parent=1 // pred_check_branch
      %478 = sbr.rel (0) target = $region37
    $region36: #{tpu_custom_call.1} parent=1 // pred_region
      %479 = dma.done [#allocation4], 16
    $region37: #{tpu_custom_call.1} parent=1 // pred_fallthru
      _
    %480 = vsyncpa [#allocation4], 1

</llo_original>
